<compile_context>
chip_gen: v5e
topology: v5e:2x2
jax: 0.10.0
libtpu: 0.0.40
codegen_flags: <defaults>
</compile_context>

<pallas_src>
import jax
import jax.numpy as jnp
from jax.experimental import pallas as pl
from jax.experimental.pallas import tpu as pltpu

_LANE = 128      # vreg lane width (f32).  For very large hidden sizes on v6e/v7x,
                 # padding hidden dims to 256 (MXU is 2x256^2 there) improves MXU
                 # utilization; irrelevant at hidden=32, so keep 128 by default.
_SUBLANE = 8     # vreg sublane count (f32)


def _round_up(x, m):
    return ((x + m - 1) // m) * m


def _make_mlp_kernel(num_layers):
    """Fused MLP kernel.  Ref order: (x_ref, w0, b0, w1, b1, ..., o_ref)."""

    def kernel(*refs):
        x_ref = refs[0]
        o_ref = refs[-1]
        wb = refs[1:-1]

        cdt = wb[0].dtype                  # compute dtype = weight storage dtype (bf16)
        h = x_ref[...]
        if h.dtype != cdt:                 # bf16 inputs pass straight through (no cast)
            h = h.astype(cdt)
        for li in range(num_layers):
            w = wb[2 * li][...]            # (k, n) weight, bf16
            b = wb[2 * li + 1][...]        # (1, n) bias,   f32 -> broadcasts over rows
            h = jnp.dot(h, w, preferred_element_type=jnp.float32) + b
            if li < num_layers - 1:
                # ReLU; Dropout = identity in eval mode.
                # TODO(synk): training-mode dropout (Bernoulli mask via
                # pltpu.prng_seed/prng_random_bits) not implemented.
                h = jnp.maximum(h, 0.0).astype(cdt)
        # Last layer is true n_vars wide -> tiny (16 B/row) HBM writeback.
        o_ref[...] = h.astype(o_ref.dtype)

    return kernel


def prepare_params(weights, biases, n_features, *, param_dtype=jnp.bfloat16,
                   lane_pad=_LANE):
    """One-time parameter prep (hoisted out of the per-call forward path).

    Args:
      weights: list of (in_dim, out_dim) float32 arrays (torch weights .T'd)
      biases:  list of (out_dim,) float32 arrays
    Returns:
      (padded_weights, padded_biases): intermediate-layer output dims zero-padded
      to a lane multiple (exact zeros -> results unchanged), final layer kept at
      its true n_vars width; weights cast to `param_dtype`, biases kept f32 as
      (1, n) rows.
    """
    num_layers = len(weights)
    dims = [n_features] + [w.shape[1] for w in weights]
    for li, (w, b) in enumerate(zip(weights, biases)):
        assert w.shape == (dims[li], dims[li + 1]), (
            f"layer {li}: expected weight shape {(dims[li], dims[li + 1])} "
            f"(in, out) but got {w.shape}; transpose torch weights.")
        assert b.shape == (dims[li + 1],)

    wp, bp = [], []
    prev_in = n_features                       # x itself is left unpadded
    for li, (w, b) in enumerate(zip(weights, biases)):
        k, n = w.shape
        last = li == num_layers - 1
        n_pad = n if last else _round_up(n, lane_pad)
        wpad = jnp.zeros((prev_in, n_pad), param_dtype)
        wpad = wpad.at[:k, :n].set(w.astype(param_dtype))
        bpad = jnp.zeros((1, n_pad), jnp.float32)
        bpad = bpad.at[0, :n].set(b.astype(jnp.float32))
        wp.append(wpad)
        bp.append(bpad)
        prev_in = n_pad
    return wp, bp


def feedforward_network(x, padded_weights, padded_biases, *, batch_tile=None):
    """Runs the fused MLP Pallas kernel.

    Args:
      x:               (B, n_features) float32 (or bfloat16 for halved input DMA)
      padded_weights / padded_biases: output of prepare_params()
    Returns:
      (B, n_vars) float32
    """
    B, n_features = x.shape
    num_layers = len(padded_weights)
    n_vars = int(padded_weights[-1].shape[1])
    assert padded_weights[0].shape[0] == n_features

    wb_flat = []
    for w, b in zip(padded_weights, padded_biases):
        wb_flat.append(w)
        wb_flat.append(b)
    param_bytes = sum(int(a.size) * a.dtype.itemsize for a in wb_flat)
    max_width = max(int(w.shape[1]) for w in padded_weights)

    # ---- generation-aware VMEM cap: ~48 MiB on v7x (64 MiB/TC), ~96 MiB on v5e/v6e --
    try:
        phys_vmem = int(pltpu.get_tpu_info().vmem_capacity_bytes)
    except Exception:
        phys_vmem = 128 << 20
    vmem_cap = min((phys_vmem * 3) // 4, 100 << 20)

    # ---- batch tiling: large tiles, but >=2 grid steps when possible (v7x megacore) --
    if batch_tile is None:
        if B <= 512:
            batch_tile = _round_up(max(B, _SUBLANE), _SUBLANE)      # single step
        elif B <= 4096:
            batch_tile = _round_up(pl.cdiv(B, 2), _SUBLANE)         # 2 steps, 512..2048 rows
        else:
            batch_tile = 2048                                       # many pipelined steps
        # Shrink tile if its footprint (activations + params + slack) would blow VMEM.
        per_row_bytes = 2 * 4 * (n_features + n_vars) + 12 * max_width
        while batch_tile > 512 and (batch_tile * per_row_bytes + 2 * param_bytes
                                    + (4 << 20)) > vmem_cap:
            batch_tile = _round_up(batch_tile // 2, _SUBLANE)
    else:
        batch_tile = max(_SUBLANE, _round_up(batch_tile, _SUBLANE))

    # No wrapper-side jnp.pad of x: Pallas clips the ragged last block's
    # reads/writes, so no extra HBM copy of the input is materialized.
    grid = (pl.cdiv(B, batch_tile),)

    x_spec = pl.BlockSpec((batch_tile, n_features), lambda i: (i, 0))
    out_spec = pl.BlockSpec((batch_tile, n_vars), lambda i: (i, 0))
    param_specs = []
    for w, b in zip(padded_weights, padded_biases):
        # Constant index_map: blocks fetched once, stay VMEM-resident across steps.
        param_specs.append(pl.BlockSpec(w.shape, lambda i: (0, 0)))
        param_specs.append(pl.BlockSpec(b.shape, lambda i: (0, 0)))

    # ---- VMEM budget: double-buffered x/out tiles + params + live activations ----
    tile_io_bytes = batch_tile * (n_features * x.dtype.itemsize + n_vars * 4)
    act_bytes = 3 * batch_tile * max_width * 4
    est = 2 * tile_io_bytes + 2 * param_bytes + act_bytes + (4 << 20)
    vmem_limit = int(min(max(est, 32 << 20), vmem_cap))

    kernel = _make_mlp_kernel(num_layers)
    fn = pl.pallas_call(
        kernel,
        out_shape=jax.ShapeDtypeStruct((B, n_vars), jnp.float32),
        grid_spec=pltpu.PrefetchScalarGridSpec(
            num_scalar_prefetch=0,
            grid=grid,
            in_specs=[x_spec] + param_specs,
            out_specs=out_spec,
        ),
        compiler_params=pltpu.CompilerParams(
            dimension_semantics=("parallel",),
            vmem_limit_bytes=vmem_limit,
        ),
    )
    return fn(x, *wb_flat)


def init_params(key, n_features, hidden_size, layers, n_vars):
    """Deterministic init matching the module's layer shapes (weights as (in, out))."""
    dims = [n_features] + [hidden_size] * layers + [n_vars]
    weights, biases = [], []
    for li in range(len(dims) - 1):
        key, kw, kb = jax.random.split(key, 3)
        bound = 1.0 / jnp.sqrt(dims[li])       # torch.nn.Linear default init range
        weights.append(
            jax.random.uniform(kw, (dims[li], dims[li + 1]),
                               minval=-bound, maxval=bound, dtype=jnp.float32))
        biases.append(
            jax.random.uniform(kb, (dims[li + 1],),
                               minval=-bound, maxval=bound, dtype=jnp.float32))
    return weights, biases


def reference_forward(x, weights, biases, *, param_dtype=jnp.bfloat16):
    """Plain-JAX reference using the same bf16-operand / f32-accumulate math."""
    h = x
    n = len(weights)
    for li, (w, b) in enumerate(zip(weights, biases)):
        hq = h.astype(param_dtype).astype(jnp.float32)
        wq = w.astype(param_dtype).astype(jnp.float32)
        h = hq @ wq + b
        if li < n - 1:
            h = jnp.maximum(h, 0.0)            # dropout = eval identity
    return h


if __name__ == "__main__":
    # Small shapes consistent with the module; batch large enough to exercise a
    # multi-step pipelined grid (1024 rows -> two 512-row tiles -> 2 grid steps).
    n_features = 16
    hidden_size = 32
    layers = 2          # -> 1 hidden Linear in addition to first/output
    n_vars = 4
    batch = 1024

    key = jax.random.PRNGKey(0)
    key, kx = jax.random.split(key)
    x = jax.random.normal(kx, (batch, n_features), dtype=jnp.float32)

    weights, biases = init_params(key, n_features, hidden_size, layers, n_vars)
    # Param padding / bf16 cast done ONCE here, not inside the forward path.
    wp, bp = prepare_params(weights, biases, n_features)

    out = feedforward_network(x, wp, bp)
    out = jax.block_until_ready(out)

    ref = reference_forward(x, weights, biases)
    assert out.shape == (batch, n_vars)
    assert jnp.allclose(out, ref, atol=2e-3, rtol=2e-3), (
        float(jnp.max(jnp.abs(out - ref))))

    print("KERNEL_OK")
</pallas_src>

<mosaic_0001>
module attributes {stable_mosaic.version = 11 : i64} {
  func.func @kernel(%arg0: i32, %arg1: memref<512x16xf32, #tpu.memory_space<vmem>>, %arg2: memref<16x128xbf16, #tpu.memory_space<vmem>>, %arg3: memref<1x128xf32, #tpu.memory_space<vmem>>, %arg4: memref<128x128xbf16, #tpu.memory_space<vmem>>, %arg5: memref<1x128xf32, #tpu.memory_space<vmem>>, %arg6: memref<128x4xbf16, #tpu.memory_space<vmem>>, %arg7: memref<1x4xf32, #tpu.memory_space<vmem>>, %arg8: memref<512x4xf32, #tpu.memory_space<vmem>>) attributes {dimension_semantics = [#tpu.dimension_semantics<parallel>], iteration_bounds = array<i64: 2>, scalar_prefetch = 0 : i64, scratch_operands = 0 : i64, tpu.core_type = #tpu.core_type<tc>, window_params = [{transform_indices = @transform_0, window_bounds = array<i64: 512, 16>}, {pipeline_mode = #tpu.pipeline_mode<synchronous>, transform_indices = @transform_1, window_bounds = array<i64: 16, 128>}, {pipeline_mode = #tpu.pipeline_mode<synchronous>, transform_indices = @transform_2, window_bounds = array<i64: 1, 128>}, {pipeline_mode = #tpu.pipeline_mode<synchronous>, transform_indices = @transform_3, window_bounds = array<i64: 128, 128>}, {pipeline_mode = #tpu.pipeline_mode<synchronous>, transform_indices = @transform_4, window_bounds = array<i64: 1, 128>}, {pipeline_mode = #tpu.pipeline_mode<synchronous>, transform_indices = @transform_5, window_bounds = array<i64: 128, 4>}, {pipeline_mode = #tpu.pipeline_mode<synchronous>, transform_indices = @transform_6, window_bounds = array<i64: 1, 4>}, {transform_indices = @transform_7, window_bounds = array<i64: 512, 4>}]} {
    %c0 = arith.constant 0 : index
    %c0_0 = arith.constant 0 : index
    %0 = vector.load %arg1[%c0, %c0_0] : memref<512x16xf32, #tpu.memory_space<vmem>>, vector<512x16xf32>
    %1 = arith.truncf %0 : vector<512x16xf32> to vector<512x16xbf16>
    %c0_1 = arith.constant 0 : index
    %c0_2 = arith.constant 0 : index
    %2 = vector.load %arg2[%c0_1, %c0_2] : memref<16x128xbf16, #tpu.memory_space<vmem>>, vector<16x128xbf16>
    %c0_3 = arith.constant 0 : index
    %c0_4 = arith.constant 0 : index
    %3 = vector.load %arg3[%c0_3, %c0_4] : memref<1x128xf32, #tpu.memory_space<vmem>>, vector<1x128xf32>
    %cst = arith.constant dense<0.000000e+00> : vector<512x128xf32>
    %4 = tpu.matmul %1, %2, %cst {dimension_numbers = #tpu.dot_dimension_numbers<[1], [0], [0], [1], [0, 0, 1, 1], [], []>} : vector<512x16xbf16>, vector<16x128xbf16>, vector<512x128xf32> -> vector<512x128xf32>
    %5 = vector.broadcast %3 : vector<1x128xf32> to vector<512x128xf32>
    %6 = arith.addf %4, %5 : vector<512x128xf32>
    %cst_5 = arith.constant 0.000000e+00 : f32
    %7 = vector.broadcast %cst_5 : f32 to vector<512x128xf32>
    %8 = arith.maximumf %6, %7 : vector<512x128xf32>
    %9 = arith.truncf %8 : vector<512x128xf32> to vector<512x128xbf16>
    %c0_6 = arith.constant 0 : index
    %c0_7 = arith.constant 0 : index
    %10 = vector.load %arg4[%c0_6, %c0_7] : memref<128x128xbf16, #tpu.memory_space<vmem>>, vector<128x128xbf16>
    %c0_8 = arith.constant 0 : index
    %c0_9 = arith.constant 0 : index
    %11 = vector.load %arg5[%c0_8, %c0_9] : memref<1x128xf32, #tpu.memory_space<vmem>>, vector<1x128xf32>
    %cst_10 = arith.constant dense<0.000000e+00> : vector<512x128xf32>
    %12 = tpu.matmul %9, %10, %cst_10 {dimension_numbers = #tpu.dot_dimension_numbers<[1], [0], [0], [1], [0, 0, 1, 1], [], []>} : vector<512x128xbf16>, vector<128x128xbf16>, vector<512x128xf32> -> vector<512x128xf32>
    %13 = vector.broadcast %11 : vector<1x128xf32> to vector<512x128xf32>
    %14 = arith.addf %12, %13 : vector<512x128xf32>
    %cst_11 = arith.constant 0.000000e+00 : f32
    %15 = vector.broadcast %cst_11 : f32 to vector<512x128xf32>
    %16 = arith.maximumf %14, %15 : vector<512x128xf32>
    %17 = arith.truncf %16 : vector<512x128xf32> to vector<512x128xbf16>
    %c0_12 = arith.constant 0 : index
    %c0_13 = arith.constant 0 : index
    %18 = vector.load %arg6[%c0_12, %c0_13] : memref<128x4xbf16, #tpu.memory_space<vmem>>, vector<128x4xbf16>
    %c0_14 = arith.constant 0 : index
    %c0_15 = arith.constant 0 : index
    %19 = vector.load %arg7[%c0_14, %c0_15] : memref<1x4xf32, #tpu.memory_space<vmem>>, vector<1x4xf32>
    %cst_16 = arith.constant dense<0.000000e+00> : vector<512x4xf32>
    %20 = tpu.matmul %17, %18, %cst_16 {dimension_numbers = #tpu.dot_dimension_numbers<[1], [0], [0], [1], [0, 0, 1, 1], [], []>} : vector<512x128xbf16>, vector<128x4xbf16>, vector<512x4xf32> -> vector<512x4xf32>
    %21 = vector.broadcast %19 : vector<1x4xf32> to vector<512x4xf32>
    %22 = arith.addf %20, %21 : vector<512x4xf32>
    %c0_17 = arith.constant 0 : index
    %c0_18 = arith.constant 0 : index
    %23 = vector.load %arg8[%c0_17, %c0_18] : memref<512x4xf32, #tpu.memory_space<vmem>>, vector<512x4xf32>
    tpu.vector_store %arg8[%c0_17, %c0_18], %22 {strides = array<i32>} : memref<512x4xf32, #tpu.memory_space<vmem>>, vector<512x4xf32>,
    return
  }
  func.func @transform_0(%arg0: i32) -> (i32, i32) {
    %c0_i32 = arith.constant 0 : i32
    %c0_i32_0 = arith.constant 0 : i32
    return %arg0, %c0_i32 : i32, i32
  }
  func.func @transform_1(%arg0: i32) -> (i32, i32) {
    %c0_i32 = arith.constant 0 : i32
    %c0_i32_0 = arith.constant 0 : i32
    %c0_i32_1 = arith.constant 0 : i32
    return %c0_i32, %c0_i32_0 : i32, i32
  }
  func.func @transform_2(%arg0: i32) -> (i32, i32) {
    %c0_i32 = arith.constant 0 : i32
    %c0_i32_0 = arith.constant 0 : i32
    %c0_i32_1 = arith.constant 0 : i32
    return %c0_i32, %c0_i32_0 : i32, i32
  }
  func.func @transform_3(%arg0: i32) -> (i32, i32) {
    %c0_i32 = arith.constant 0 : i32
    %c0_i32_0 = arith.constant 0 : i32
    %c0_i32_1 = arith.constant 0 : i32
    return %c0_i32, %c0_i32_0 : i32, i32
  }
  func.func @transform_4(%arg0: i32) -> (i32, i32) {
    %c0_i32 = arith.constant 0 : i32
    %c0_i32_0 = arith.constant 0 : i32
    %c0_i32_1 = arith.constant 0 : i32
    return %c0_i32, %c0_i32_0 : i32, i32
  }
  func.func @transform_5(%arg0: i32) -> (i32, i32) {
    %c0_i32 = arith.constant 0 : i32
    %c0_i32_0 = arith.constant 0 : i32
    %c0_i32_1 = arith.constant 0 : i32
    return %c0_i32, %c0_i32_0 : i32, i32
  }
  func.func @transform_6(%arg0: i32) -> (i32, i32) {
    %c0_i32 = arith.constant 0 : i32
    %c0_i32_0 = arith.constant 0 : i32
    %c0_i32_1 = arith.constant 0 : i32
    return %c0_i32, %c0_i32_0 : i32, i32
  }
  func.func @transform_7(%arg0: i32) -> (i32, i32) {
    %c0_i32 = arith.constant 0 : i32
    %c0_i32_0 = arith.constant 0 : i32
    return %arg0, %c0_i32 : i32, i32
  }
}

</mosaic_0001>

<llo_original>
// kernel: tpu_custom_call.1
$region0: #{tpu_custom_call.1}
  #allocation0 [shape = 'u32[]', space=smem, size = 0x4, offset = 0x4, fixed_abs, tag = 'smem constant byte address 0x4 - core index']
  #allocation1 [shape = 'u32[72,128]{1,0:T(1,128)}', space=vmem, size = 0x9000, scoped, tag = 'internal scratch']
  %s0 = inlined_call_operand.vmem [shape: f32[1024,16], index: 0, kind: input, shape index: {}]
  %s1 = inlined_call_operand.vmem [shape: bf16[16,128], index: 1, kind: input, shape index: {}]
  %s2 = inlined_call_operand.vmem [shape: f32[1,128], index: 2, kind: input, shape index: {}]
  %s3 = inlined_call_operand.vmem [shape: bf16[128,128], index: 3, kind: input, shape index: {}]
  %s4 = inlined_call_operand.vmem [shape: f32[1,128], index: 4, kind: input, shape index: {}]
  %s5 = inlined_call_operand.vmem [shape: bf16[128,4], index: 5, kind: input, shape index: {}]
  %s6 = inlined_call_operand.vmem [shape: f32[1,4], index: 6, kind: input, shape index: {}]
  %s7 = inlined_call_operand.vmem [shape: f32[1024,4], index: 7, kind: output, shape index: {}]
  %s8 = sld [smem:[#allocation0]]
  $region61: #{tpu_custom_call.1} parent=0
    _
  %s10 = ssub.s32 1, %s8
  %s11 = scalar_select 0, %s10, %s8
  loop: start=0, step=1, limit=4
  $region2: #{tpu_custom_call.1} parent=0 // loop_pre_header
    _
  $region3: #{tpu_custom_call.1} parent=0 // loop_header
    %s13 = sphi 0, %s17
    %p14 = scmp.ge.s32.totalorder %s13, 4
    %s23 = sphi 0, %s25
    %s26 = sphi 0, %s23
    %s27 = sphi 0, %s26
    %s43 = sphi 0, %s27
    %s47 = sphi 0, %s47
    %s49 = sphi 0, %s47
    %s50 = sphi 0, %s49
    %s64 = sphi 0, %s50
    %s68 = sphi 0, %s68
    %s70 = sphi 0, %s68
    %s71 = sphi 0, %s70
    %s85 = sphi 0, %s71
    %s89 = sphi 0, %s89
    %s91 = sphi 0, %s89
    %s92 = sphi 0, %s91
    %s106 = sphi 0, %s92
    %s110 = sphi 0, %s110
    %s112 = sphi 0, %s110
    %s113 = sphi 0, %s112
    %s127 = sphi 0, %s113
    %s131 = sphi 0, %s131
    %s133 = sphi 0, %s131
    %s134 = sphi 0, %s133
    %s148 = sphi 0, %s134
    %s152 = sphi 0, %s152
    %s154 = sphi 0, %s152
    %s155 = sphi 0, %s154
    %s169 = sphi 0, %s155
    %s175 = sphi 0, %s177
    %s178 = sphi 0, %s175
    %s179 = sphi 0, %s178
    %s195 = sphi 0, %s179
  $region4: #{tpu_custom_call.1} parent=0 // loop_header_branch
    %16 = sbr.rel (%p14) target = $region8
  $region5: #{tpu_custom_call.1} parent=0 // loop_body
    %s18 = ssub.s32 %s13, 1
    %s19 = ssub.s32 %s13, 2
    %s20 = sadd.s32 %s13, 1
    %s21 = ssub.s32 %s13, %s20
    %p22 = scmp.eq.s32.totalorder %s21, 0
    %s24 = sadd.s32 %s23, 1
    %s25 = scalar_select %p22, %s23, %s24
    %p28 = pneg %p22
    %p29 = scmp.eq.s32.totalorder %s13, 1
    %p30 = por %p28, %p29
    %p31 = scmp.ne.s32.totalorder %s23, %s26
    %p32 = scmp.eq.s32.totalorder %s13, 0
    %p33 = por %p31, %p32
    %p34 = scmp.ne.s32.totalorder %s23, %s26
    %p35 = scmp.eq.s32.totalorder %s18, 1
    %p36 = por %p34, %p35
    %p37 = scmp.ne.s32.totalorder %s26, %s27
    %p38 = scmp.eq.s32.totalorder %s18, 0
    %p39 = por %p37, %p38
    %p40 = scmp.ne.s32.totalorder %s26, %s27
    %p41 = scmp.eq.s32.totalorder %s19, 1
    %p42 = por %p40, %p41
    %p44 = scmp.ne.s32.totalorder %s27, %s43
    %p45 = scmp.eq.s32.totalorder %s19, 0
    %p46 = por %p44, %p45
    %s48 = sadd.s32 %s47, 1
    %p51 = scmp.eq.s32.totalorder %s13, 1
    %p52 = scmp.ne.s32.totalorder %s47, %s49
    %p53 = scmp.eq.s32.totalorder %s13, 0
    %p54 = por %p52, %p53
    %p55 = scmp.ne.s32.totalorder %s47, %s49
    %p56 = scmp.eq.s32.totalorder %s18, 1
    %p57 = por %p55, %p56
    %p58 = scmp.ne.s32.totalorder %s49, %s50
    %p59 = scmp.eq.s32.totalorder %s18, 0
    %p60 = por %p58, %p59
    %p61 = scmp.ne.s32.totalorder %s49, %s50
    %p62 = scmp.eq.s32.totalorder %s19, 1
    %p63 = por %p61, %p62
    %p65 = scmp.ne.s32.totalorder %s50, %s64
    %p66 = scmp.eq.s32.totalorder %s19, 0
    %p67 = por %p65, %p66
    %s69 = sadd.s32 %s68, 1
    %p72 = scmp.eq.s32.totalorder %s13, 1
    %p73 = scmp.ne.s32.totalorder %s68, %s70
    %p74 = scmp.eq.s32.totalorder %s13, 0
    %p75 = por %p73, %p74
    %p76 = scmp.ne.s32.totalorder %s68, %s70
    %p77 = scmp.eq.s32.totalorder %s18, 1
    %p78 = por %p76, %p77
    %p79 = scmp.ne.s32.totalorder %s70, %s71
    %p80 = scmp.eq.s32.totalorder %s18, 0
    %p81 = por %p79, %p80
    %p82 = scmp.ne.s32.totalorder %s70, %s71
    %p83 = scmp.eq.s32.totalorder %s19, 1
    %p84 = por %p82, %p83
    %p86 = scmp.ne.s32.totalorder %s71, %s85
    %p87 = scmp.eq.s32.totalorder %s19, 0
    %p88 = por %p86, %p87
    %s90 = sadd.s32 %s89, 1
    %p93 = scmp.eq.s32.totalorder %s13, 1
    %p94 = scmp.ne.s32.totalorder %s89, %s91
    %p95 = scmp.eq.s32.totalorder %s13, 0
    %p96 = por %p94, %p95
    %p97 = scmp.ne.s32.totalorder %s89, %s91
    %p98 = scmp.eq.s32.totalorder %s18, 1
    %p99 = por %p97, %p98
    %p100 = scmp.ne.s32.totalorder %s91, %s92
    %p101 = scmp.eq.s32.totalorder %s18, 0
    %p102 = por %p100, %p101
    %p103 = scmp.ne.s32.totalorder %s91, %s92
    %p104 = scmp.eq.s32.totalorder %s19, 1
    %p105 = por %p103, %p104
    %p107 = scmp.ne.s32.totalorder %s92, %s106
    %p108 = scmp.eq.s32.totalorder %s19, 0
    %p109 = por %p107, %p108
    %s111 = sadd.s32 %s110, 1
    %p114 = scmp.eq.s32.totalorder %s13, 1
    %p115 = scmp.ne.s32.totalorder %s110, %s112
    %p116 = scmp.eq.s32.totalorder %s13, 0
    %p117 = por %p115, %p116
    %p118 = scmp.ne.s32.totalorder %s110, %s112
    %p119 = scmp.eq.s32.totalorder %s18, 1
    %p120 = por %p118, %p119
    %p121 = scmp.ne.s32.totalorder %s112, %s113
    %p122 = scmp.eq.s32.totalorder %s18, 0
    %p123 = por %p121, %p122
    %p124 = scmp.ne.s32.totalorder %s112, %s113
    %p125 = scmp.eq.s32.totalorder %s19, 1
    %p126 = por %p124, %p125
    %p128 = scmp.ne.s32.totalorder %s113, %s127
    %p129 = scmp.eq.s32.totalorder %s19, 0
    %p130 = por %p128, %p129
    %s132 = sadd.s32 %s131, 1
    %p135 = scmp.eq.s32.totalorder %s13, 1
    %p136 = scmp.ne.s32.totalorder %s131, %s133
    %p137 = scmp.eq.s32.totalorder %s13, 0
    %p138 = por %p136, %p137
    %p139 = scmp.ne.s32.totalorder %s131, %s133
    %p140 = scmp.eq.s32.totalorder %s18, 1
    %p141 = por %p139, %p140
    %p142 = scmp.ne.s32.totalorder %s133, %s134
    %p143 = scmp.eq.s32.totalorder %s18, 0
    %p144 = por %p142, %p143
    %p145 = scmp.ne.s32.totalorder %s133, %s134
    %p146 = scmp.eq.s32.totalorder %s19, 1
    %p147 = por %p145, %p146
    %p149 = scmp.ne.s32.totalorder %s134, %s148
    %p150 = scmp.eq.s32.totalorder %s19, 0
    %p151 = por %p149, %p150
    %s153 = sadd.s32 %s152, 1
    %p156 = scmp.eq.s32.totalorder %s13, 1
    %p157 = scmp.ne.s32.totalorder %s152, %s154
    %p158 = scmp.eq.s32.totalorder %s13, 0
    %p159 = por %p157, %p158
    %p160 = scmp.ne.s32.totalorder %s152, %s154
    %p161 = scmp.eq.s32.totalorder %s18, 1
    %p162 = por %p160, %p161
    %p163 = scmp.ne.s32.totalorder %s154, %s155
    %p164 = scmp.eq.s32.totalorder %s18, 0
    %p165 = por %p163, %p164
    %p166 = scmp.ne.s32.totalorder %s154, %s155
    %p167 = scmp.eq.s32.totalorder %s19, 1
    %p168 = por %p166, %p167
    %p170 = scmp.ne.s32.totalorder %s155, %s169
    %p171 = scmp.eq.s32.totalorder %s19, 0
    %p172 = por %p170, %p171
    %s173 = ssub.s32 %s13, %s20
    %p174 = scmp.eq.s32.totalorder %s173, 0
    %s176 = sadd.s32 %s175, 1
    %s177 = scalar_select %p174, %s175, %s176
    %p180 = pneg %p174
    %p181 = scmp.eq.s32.totalorder %s13, 1
    %p182 = por %p180, %p181
    %p183 = scmp.ne.s32.totalorder %s175, %s178
    %p184 = scmp.eq.s32.totalorder %s13, 0
    %p185 = por %p183, %p184
    %p186 = scmp.ne.s32.totalorder %s175, %s178
    %p187 = scmp.eq.s32.totalorder %s18, 1
    %p188 = por %p186, %p187
    %p189 = scmp.ne.s32.totalorder %s178, %s179
    %p190 = scmp.eq.s32.totalorder %s18, 0
    %p191 = por %p189, %p190
    %p192 = scmp.ne.s32.totalorder %s178, %s179
    %p193 = scmp.eq.s32.totalorder %s19, 1
    %p194 = por %p192, %p193
    %p196 = scmp.ne.s32.totalorder %s179, %s195
    %p197 = scmp.eq.s32.totalorder %s19, 0
    %p198 = por %p196, %p197
    %p199 = scmp.le.s32.totalorder 1, %s13
    %p200 = scmp.lt.s32.totalorder %s13, 3
    %p201 = pnand %p199, %p200
    %p202 = pneg %p201
    // Predicated region
    $region9: #{tpu_custom_call.1} parent=5 // pred_check
      _
    $region10: #{tpu_custom_call.1} parent=5 // pred_check_branch
      %204 = sbr.rel (%p201) target = $region12
    $region11: #{tpu_custom_call.1} parent=5 // pred_region
      %s205 = ssub.s32 %s13, 1
      // Predicated region
      $region13: #{tpu_custom_call.1} parent=11 // pred_check
        %p206 = pneg %p60
      $region14: #{tpu_custom_call.1} parent=11 // pred_check_branch
        %208 = sbr.rel (%p206) target = $region16
      $region15: #{tpu_custom_call.1} parent=11 // pred_region
        _
      $region16: #{tpu_custom_call.1} parent=11 // pred_fallthru
        _
      // Predicated region
      $region17: #{tpu_custom_call.1} parent=11 // pred_check
        %p209 = pneg %p81
      $region18: #{tpu_custom_call.1} parent=11 // pred_check_branch
        %211 = sbr.rel (%p209) target = $region20
      $region19: #{tpu_custom_call.1} parent=11 // pred_region
        _
      $region20: #{tpu_custom_call.1} parent=11 // pred_fallthru
        _
      // Predicated region
      $region21: #{tpu_custom_call.1} parent=11 // pred_check
        %p212 = pneg %p102
      $region22: #{tpu_custom_call.1} parent=11 // pred_check_branch
        %214 = sbr.rel (%p212) target = $region24
      $region23: #{tpu_custom_call.1} parent=11 // pred_region
        _
      $region24: #{tpu_custom_call.1} parent=11 // pred_fallthru
        _
      // Predicated region
      $region25: #{tpu_custom_call.1} parent=11 // pred_check
        %p215 = pneg %p123
      $region26: #{tpu_custom_call.1} parent=11 // pred_check_branch
        %217 = sbr.rel (%p215) target = $region28
      $region27: #{tpu_custom_call.1} parent=11 // pred_region
        _
      $region28: #{tpu_custom_call.1} parent=11 // pred_fallthru
        _
      // Predicated region
      $region29: #{tpu_custom_call.1} parent=11 // pred_check
        %p218 = pneg %p144
      $region30: #{tpu_custom_call.1} parent=11 // pred_check_branch
        %220 = sbr.rel (%p218) target = $region32
      $region31: #{tpu_custom_call.1} parent=11 // pred_region
        _
      $region32: #{tpu_custom_call.1} parent=11 // pred_fallthru
        _
      // Predicated region
      $region33: #{tpu_custom_call.1} parent=11 // pred_check
        %p221 = pneg %p165
      $region34: #{tpu_custom_call.1} parent=11 // pred_check_branch
        %223 = sbr.rel (%p221) target = $region36
      $region35: #{tpu_custom_call.1} parent=11 // pred_region
        _
      $region36: #{tpu_custom_call.1} parent=11 // pred_fallthru
        _
    $region12: #{tpu_custom_call.1} parent=5 // pred_fallthru
      _
    %p224 = scmp.lt.s32.totalorder %s13, 2
    // Predicated region
    $region37: #{tpu_custom_call.1} parent=5 // pred_check
      %p225 = pneg %p224
    $region38: #{tpu_custom_call.1} parent=5 // pred_check_branch
      %227 = sbr.rel (%p225) target = $region40
    $region39: #{tpu_custom_call.1} parent=5 // pred_region
      // Predicated region
      $region41: #{tpu_custom_call.1} parent=39 // pred_check
        %p228 = pneg %p33
      $region42: #{tpu_custom_call.1} parent=39 // pred_check_branch
        %230 = sbr.rel (%p228) target = $region44
      $region43: #{tpu_custom_call.1} parent=39 // pred_region
        %s231 = smul.u32 64, %s13
        %p232 = scmp.lt.s32.totalorder %s231, 127
        %s233 = scalar_select %p232, %s231, 127
        %s234 = smul.addr %s233, 8
        %s235 = scalar_lea.vmem %s0, %s234
        %s236 = smul.u32 64, %s13
      $region44: #{tpu_custom_call.1} parent=39 // pred_fallthru
        _
    $region40: #{tpu_custom_call.1} parent=5 // pred_fallthru
      _
    %p237 = scmp.le.s32.totalorder 1, %s13
    %p238 = scmp.lt.s32.totalorder %s13, 3
    %p239 = pnand %p237, %p238
    %p240 = pneg %p239
    // Predicated region
    $region45: #{tpu_custom_call.1} parent=5 // pred_check
      _
    $region46: #{tpu_custom_call.1} parent=5 // pred_check_branch
      %242 = sbr.rel (%p239) target = $region48
    $region47: #{tpu_custom_call.1} parent=5 // pred_region
      %s243 = ssub.s32 %s13, 1
      %s244 = smul.u32 64, %s18
      %p245 = scmp.lt.s32.totalorder %s244, 127
      %s246 = scalar_select %p245, %s244, 127
      %s247 = smul.addr %s246, 8
      %s248 = scalar_lea.vmem %s0, %s247
      %p249 = pneg %p39
      %p250 = pneg %p36
      %p251 = pneg %p60
      %p252 = pneg %p57
      %p253 = pneg %p81
      %p254 = pneg %p78
      %p255 = pneg %p102
      %p256 = pneg %p99
      %p257 = pneg %p123
      %p258 = pneg %p120
      %p259 = pneg %p144
      %p260 = pneg %p141
      %p261 = pneg %p165
      %p262 = pneg %p162
      %p263 = pneg %p191
      %p264 = pneg %p188
      %s265 = smul.u32 64, %s18
      %p266 = scmp.lt.s32.totalorder %s265, 127
      %s267 = scalar_select %p266, %s265, 127
      %s268 = smul.addr %s267, 8
      %s269 = scalar_lea.vmem %s7, %s268
      %s270 = smul.u32 64, %s18
      %p271 = scmp.lt.s32.totalorder %s270, 127
      %s272 = scalar_select %p271, %s270, 127
      %s273 = smul.addr %s272, 8
      %s274 = scalar_lea.vmem %s0, %s273
      %s275 = smul.u32 64, %s18
      %s276 = smul.u32 64, %s18
      %p277 = scmp.lt.s32.totalorder %s276, 127
      %s278 = scalar_select %p277, %s276, 127
      %s279 = smul.addr %s278, 8
      %s280 = scalar_lea.vmem %s7, %s279
      %s281 = smul.u32 64, %s18
      %v283 = vld [vmem:[%s274] sm:$0xff]
      %v284 = vld [vmem:[%s274 + $0x8] sm:$0xff]
      %v285 = vld [vmem:[%s274 + $0x10] sm:$0xff]
      %v286 = vld [vmem:[%s274 + $0x18] sm:$0xff]
      %v287 = vld [vmem:[%s274 + $0x20] sm:$0xff]
      %v288 = vld [vmem:[%s274 + $0x28] sm:$0xff]
      %v289 = vld [vmem:[%s274 + $0x30] sm:$0xff]
      %v290 = vld [vmem:[%s274 + $0x38] sm:$0xff]
      %v291 = vld [vmem:[%s274 + $0x40] sm:$0xff]
      %v292 = vld [vmem:[%s274 + $0x48] sm:$0xff]
      %v293 = vld [vmem:[%s274 + $0x50] sm:$0xff]
      %v294 = vld [vmem:[%s274 + $0x58] sm:$0xff]
      %v295 = vld [vmem:[%s274 + $0x60] sm:$0xff]
      %v296 = vld [vmem:[%s274 + $0x68] sm:$0xff]
      %v297 = vld [vmem:[%s274 + $0x70] sm:$0xff]
      %v298 = vld [vmem:[%s274 + $0x78] sm:$0xff]
      %v299 = vld [vmem:[%s274 + $0x80] sm:$0xff]
      %v300 = vld [vmem:[%s274 + $0x88] sm:$0xff]
      %v301 = vld [vmem:[%s274 + $0x90] sm:$0xff]
      %v302 = vld [vmem:[%s274 + $0x98] sm:$0xff]
      %v303 = vld [vmem:[%s274 + $0xa0] sm:$0xff]
      %v304 = vld [vmem:[%s274 + $0xa8] sm:$0xff]
      %v305 = vld [vmem:[%s274 + $0xb0] sm:$0xff]
      %v306 = vld [vmem:[%s274 + $0xb8] sm:$0xff]
      %v307 = vld [vmem:[%s274 + $0xc0] sm:$0xff]
      %v308 = vld [vmem:[%s274 + $0xc8] sm:$0xff]
      %v309 = vld [vmem:[%s274 + $0xd0] sm:$0xff]
      %v310 = vld [vmem:[%s274 + $0xd8] sm:$0xff]
      %v311 = vld [vmem:[%s274 + $0xe0] sm:$0xff]
      %v312 = vld [vmem:[%s274 + $0xe8] sm:$0xff]
      %v313 = vld [vmem:[%s274 + $0xf0] sm:$0xff]
      %v314 = vld [vmem:[%s274 + $0xf8] sm:$0xff]
      %v315 = vld [vmem:[%s274 + $0x100] sm:$0xff]
      %v316 = vld [vmem:[%s274 + $0x108] sm:$0xff]
      %v317 = vld [vmem:[%s274 + $0x110] sm:$0xff]
      %v318 = vld [vmem:[%s274 + $0x118] sm:$0xff]
      %v319 = vld [vmem:[%s274 + $0x120] sm:$0xff]
      %v320 = vld [vmem:[%s274 + $0x128] sm:$0xff]
      %v321 = vld [vmem:[%s274 + $0x130] sm:$0xff]
      %v322 = vld [vmem:[%s274 + $0x138] sm:$0xff]
      %v323 = vld [vmem:[%s274 + $0x140] sm:$0xff]
      %v324 = vld [vmem:[%s274 + $0x148] sm:$0xff]
      %v325 = vld [vmem:[%s274 + $0x150] sm:$0xff]
      %v326 = vld [vmem:[%s274 + $0x158] sm:$0xff]
      %v327 = vld [vmem:[%s274 + $0x160] sm:$0xff]
      %v328 = vld [vmem:[%s274 + $0x168] sm:$0xff]
      %v329 = vld [vmem:[%s274 + $0x170] sm:$0xff]
      %v330 = vld [vmem:[%s274 + $0x178] sm:$0xff]
      %v331 = vld [vmem:[%s274 + $0x180] sm:$0xff]
      %v332 = vld [vmem:[%s274 + $0x188] sm:$0xff]
      %v333 = vld [vmem:[%s274 + $0x190] sm:$0xff]
      %v334 = vld [vmem:[%s274 + $0x198] sm:$0xff]
      %v335 = vld [vmem:[%s274 + $0x1a0] sm:$0xff]
      %v336 = vld [vmem:[%s274 + $0x1a8] sm:$0xff]
      %v337 = vld [vmem:[%s274 + $0x1b0] sm:$0xff]
      %v338 = vld [vmem:[%s274 + $0x1b8] sm:$0xff]
      %v339 = vld [vmem:[%s274 + $0x1c0] sm:$0xff]
      %v340 = vld [vmem:[%s274 + $0x1c8] sm:$0xff]
      %v341 = vld [vmem:[%s274 + $0x1d0] sm:$0xff]
      %v342 = vld [vmem:[%s274 + $0x1d8] sm:$0xff]
      %v343 = vld [vmem:[%s274 + $0x1e0] sm:$0xff]
      %v344 = vld [vmem:[%s274 + $0x1e8] sm:$0xff]
      %v345 = vld [vmem:[%s274 + $0x1f0] sm:$0xff]
      %v346 = vld [vmem:[%s274 + $0x1f8] sm:$0xff]
      %v347 = vpack.c.bf16 %v284, %v283
      %v348 = vpack.c.bf16 %v286, %v285
      %v349 = vpack.c.bf16 %v288, %v287
      %v350 = vpack.c.bf16 %v290, %v289
      %v351 = vpack.c.bf16 %v292, %v291
      %v352 = vpack.c.bf16 %v294, %v293
      %v353 = vpack.c.bf16 %v296, %v295
      %v354 = vpack.c.bf16 %v298, %v297
      %v355 = vpack.c.bf16 %v300, %v299
      %v356 = vpack.c.bf16 %v302, %v301
      %v357 = vpack.c.bf16 %v304, %v303
      %v358 = vpack.c.bf16 %v306, %v305
      %v359 = vpack.c.bf16 %v308, %v307
      %v360 = vpack.c.bf16 %v310, %v309
      %v361 = vpack.c.bf16 %v312, %v311
      %v362 = vpack.c.bf16 %v314, %v313
      %v363 = vpack.c.bf16 %v316, %v315
      %v364 = vpack.c.bf16 %v318, %v317
      %v365 = vpack.c.bf16 %v320, %v319
      %v366 = vpack.c.bf16 %v322, %v321
      %v367 = vpack.c.bf16 %v324, %v323
      %v368 = vpack.c.bf16 %v326, %v325
      %v369 = vpack.c.bf16 %v328, %v327
      %v370 = vpack.c.bf16 %v330, %v329
      %v371 = vpack.c.bf16 %v332, %v331
      %v372 = vpack.c.bf16 %v334, %v333
      %v373 = vpack.c.bf16 %v336, %v335
      %v374 = vpack.c.bf16 %v338, %v337
      %v375 = vpack.c.bf16 %v340, %v339
      %v376 = vpack.c.bf16 %v342, %v341
      %v377 = vpack.c.bf16 %v344, %v343
      %v378 = vpack.c.bf16 %v346, %v345
      %v379 = vld [vmem:[%s1] sm:$0xf]
      %v380 = vld [vmem:[%s1 + $0x4] sm:$0xf]
      %v381 = vld [vmem:[%s2] sm:$0x1]
      %v383 = vperm.slane %v381, 0
      %v387 = vunpack.c.l.b16 %v379
      %v388 = vunpack.c.l.b16 %v380
      %v389 = vpack.c.b16 %v388, %v387
      %vm391 = vcmask 130048
      %v393 = vsel %vm391, %v347, 0
      %v396 = vsel %vm391, %v348, 0
      %v399 = vsel %vm391, %v349, 0
      %v402 = vsel %vm391, %v350, 0
      %v405 = vsel %vm391, %v351, 0
      %v408 = vsel %vm391, %v352, 0
      %v411 = vsel %vm391, %v353, 0
      %v414 = vsel %vm391, %v354, 0
      %v417 = vsel %vm391, %v355, 0
      %v420 = vsel %vm391, %v356, 0
      %v423 = vsel %vm391, %v357, 0
      %v426 = vsel %vm391, %v358, 0
      %v429 = vsel %vm391, %v359, 0
      %v432 = vsel %vm391, %v360, 0
      %v435 = vsel %vm391, %v361, 0
      %v438 = vsel %vm391, %v362, 0
      %v441 = vsel %vm391, %v363, 0
      %v444 = vsel %vm391, %v364, 0
      %v447 = vsel %vm391, %v365, 0
      %v450 = vsel %vm391, %v366, 0
      %v453 = vsel %vm391, %v367, 0
      %v456 = vsel %vm391, %v368, 0
      %v459 = vsel %vm391, %v369, 0
      %v462 = vsel %vm391, %v370, 0
      %v465 = vsel %vm391, %v371, 0
      %v468 = vsel %vm391, %v372, 0
      %v471 = vsel %vm391, %v373, 0
      %v474 = vsel %vm391, %v374, 0
      %v477 = vsel %vm391, %v375, 0
      %v480 = vsel %vm391, %v376, 0
      %v483 = vsel %vm391, %v377, 0
      %v486 = vsel %vm391, %v378, 0
      %488 = vmatpush.bf16.msra.mxu0 0
      %489 = vmatpush.bf16.msra.mxu0 0
      %490 = vmatpush.bf16.msra.mxu0 0
      %491 = vmatpush.bf16.msra.mxu0 0
      %492 = vmatpush.bf16.msra.mxu0 0
      %493 = vmatpush.bf16.msra.mxu0 0
      %494 = vmatpush.bf16.msra.mxu0 0
      %495 = vmatpush.bf16.msra.mxu0 %v389
      %496 = vmatmul.bf16.gmra.mxu0 %v393
      %v497 = vpop.f32.mrf.mxu0
      %v498 = vadd.f32 %v383, %v497
      %v499 = vpop.f32.mrf.mxu0
      %v500 = vadd.f32 %v383, %v499
      %501 = vmatmul.bf16.gmra.mxu0 %v396
      %v502 = vpop.f32.mrf.mxu0
      %v503 = vadd.f32 %v383, %v502
      %v504 = vpop.f32.mrf.mxu0
      %v505 = vadd.f32 %v383, %v504
      %506 = vmatmul.bf16.gmra.mxu0 %v399
      %v507 = vpop.f32.mrf.mxu0
      %v508 = vadd.f32 %v383, %v507
      %v509 = vpop.f32.mrf.mxu0
      %v510 = vadd.f32 %v383, %v509
      %511 = vmatmul.bf16.gmra.mxu0 %v402
      %v512 = vpop.f32.mrf.mxu0
      %v513 = vadd.f32 %v383, %v512
      %v514 = vpop.f32.mrf.mxu0
      %v515 = vadd.f32 %v383, %v514
      %516 = vmatmul.bf16.gmra.mxu0 %v405
      %v517 = vpop.f32.mrf.mxu0
      %v518 = vadd.f32 %v383, %v517
      %v519 = vpop.f32.mrf.mxu0
      %v520 = vadd.f32 %v383, %v519
      %521 = vmatmul.bf16.gmra.mxu0 %v408
      %v522 = vpop.f32.mrf.mxu0
      %v523 = vadd.f32 %v383, %v522
      %v524 = vpop.f32.mrf.mxu0
      %v525 = vadd.f32 %v383, %v524
      %526 = vmatmul.bf16.gmra.mxu0 %v411
      %v527 = vpop.f32.mrf.mxu0
      %v528 = vadd.f32 %v383, %v527
      %v529 = vpop.f32.mrf.mxu0
      %v530 = vadd.f32 %v383, %v529
      %531 = vmatmul.bf16.gmra.mxu0 %v414
      %v532 = vpop.f32.mrf.mxu0
      %v533 = vadd.f32 %v383, %v532
      %v534 = vpop.f32.mrf.mxu0
      %v535 = vadd.f32 %v383, %v534
      %536 = vmatmul.bf16.gmra.mxu0 %v417
      %v537 = vpop.f32.mrf.mxu0
      %v538 = vadd.f32 %v383, %v537
      %v539 = vpop.f32.mrf.mxu0
      %v540 = vadd.f32 %v383, %v539
      %541 = vmatmul.bf16.gmra.mxu0 %v420
      %v542 = vpop.f32.mrf.mxu0
      %v543 = vadd.f32 %v383, %v542
      %v544 = vpop.f32.mrf.mxu0
      %v545 = vadd.f32 %v383, %v544
      %546 = vmatmul.bf16.gmra.mxu0 %v423
      %v547 = vpop.f32.mrf.mxu0
      %v548 = vadd.f32 %v383, %v547
      %v549 = vpop.f32.mrf.mxu0
      %v550 = vadd.f32 %v383, %v549
      %551 = vmatmul.bf16.gmra.mxu0 %v426
      %v552 = vpop.f32.mrf.mxu0
      %v553 = vadd.f32 %v383, %v552
      %v554 = vpop.f32.mrf.mxu0
      %v555 = vadd.f32 %v383, %v554
      %556 = vmatmul.bf16.gmra.mxu0 %v429
      %v557 = vpop.f32.mrf.mxu0
      %v558 = vadd.f32 %v383, %v557
      %v559 = vpop.f32.mrf.mxu0
      %v560 = vadd.f32 %v383, %v559
      %561 = vmatmul.bf16.gmra.mxu0 %v432
      %v562 = vpop.f32.mrf.mxu0
      %v563 = vadd.f32 %v383, %v562
      %v564 = vpop.f32.mrf.mxu0
      %v565 = vadd.f32 %v383, %v564
      %566 = vmatmul.bf16.gmra.mxu0 %v435
      %v567 = vpop.f32.mrf.mxu0
      %v568 = vadd.f32 %v383, %v567
      %v569 = vpop.f32.mrf.mxu0
      %v570 = vadd.f32 %v383, %v569
      %571 = vmatmul.bf16.gmra.mxu0 %v438
      %v572 = vpop.f32.mrf.mxu0
      %v573 = vadd.f32 %v383, %v572
      %v574 = vpop.f32.mrf.mxu0
      %v575 = vadd.f32 %v383, %v574
      %576 = vmatmul.bf16.gmra.mxu0 %v441
      %v577 = vpop.f32.mrf.mxu0
      %v578 = vadd.f32 %v383, %v577
      %v579 = vpop.f32.mrf.mxu0
      %v580 = vadd.f32 %v383, %v579
      %581 = vmatmul.bf16.gmra.mxu0 %v444
      %v582 = vpop.f32.mrf.mxu0
      %v583 = vadd.f32 %v383, %v582
      %v584 = vpop.f32.mrf.mxu0
      %v585 = vadd.f32 %v383, %v584
      %586 = vmatmul.bf16.gmra.mxu0 %v447
      %v587 = vpop.f32.mrf.mxu0
      %v588 = vadd.f32 %v383, %v587
      %v589 = vpop.f32.mrf.mxu0
      %v590 = vadd.f32 %v383, %v589
      %591 = vmatmul.bf16.gmra.mxu0 %v450
      %v592 = vpop.f32.mrf.mxu0
      %v593 = vadd.f32 %v383, %v592
      %v594 = vpop.f32.mrf.mxu0
      %v595 = vadd.f32 %v383, %v594
      %596 = vmatmul.bf16.gmra.mxu0 %v453
      %v597 = vpop.f32.mrf.mxu0
      %v598 = vadd.f32 %v383, %v597
      %v599 = vpop.f32.mrf.mxu0
      %v600 = vadd.f32 %v383, %v599
      %601 = vmatmul.bf16.gmra.mxu0 %v456
      %v602 = vpop.f32.mrf.mxu0
      %v603 = vadd.f32 %v383, %v602
      %v604 = vpop.f32.mrf.mxu0
      %v605 = vadd.f32 %v383, %v604
      %606 = vmatmul.bf16.gmra.mxu0 %v459
      %v607 = vpop.f32.mrf.mxu0
      %v608 = vadd.f32 %v383, %v607
      %v609 = vpop.f32.mrf.mxu0
      %v610 = vadd.f32 %v383, %v609
      %611 = vmatmul.bf16.gmra.mxu0 %v462
      %v612 = vpop.f32.mrf.mxu0
      %v613 = vadd.f32 %v383, %v612
      %v614 = vpop.f32.mrf.mxu0
      %v615 = vadd.f32 %v383, %v614
      %616 = vmatmul.bf16.gmra.mxu0 %v465
      %v617 = vpop.f32.mrf.mxu0
      %v618 = vadd.f32 %v383, %v617
      %v619 = vpop.f32.mrf.mxu0
      %v620 = vadd.f32 %v383, %v619
      %621 = vmatmul.bf16.gmra.mxu0 %v468
      %v622 = vpop.f32.mrf.mxu0
      %v623 = vadd.f32 %v383, %v622
      %v624 = vpop.f32.mrf.mxu0
      %v625 = vadd.f32 %v383, %v624
      %626 = vmatmul.bf16.gmra.mxu0 %v471
      %v627 = vpop.f32.mrf.mxu0
      %v628 = vadd.f32 %v383, %v627
      %v629 = vpop.f32.mrf.mxu0
      %v630 = vadd.f32 %v383, %v629
      %631 = vmatmul.bf16.gmra.mxu0 %v474
      %v632 = vpop.f32.mrf.mxu0
      %v633 = vadd.f32 %v383, %v632
      %v634 = vpop.f32.mrf.mxu0
      %v635 = vadd.f32 %v383, %v634
      %636 = vmatmul.bf16.gmra.mxu0 %v477
      %v637 = vpop.f32.mrf.mxu0
      %v638 = vadd.f32 %v383, %v637
      %v639 = vpop.f32.mrf.mxu0
      %v640 = vadd.f32 %v383, %v639
      %641 = vmatmul.bf16.gmra.mxu0 %v480
      %v642 = vpop.f32.mrf.mxu0
      %v643 = vadd.f32 %v383, %v642
      %v644 = vpop.f32.mrf.mxu0
      %v645 = vadd.f32 %v383, %v644
      %646 = vmatmul.bf16.gmra.mxu0 %v483
      %v647 = vpop.f32.mrf.mxu0
      %v648 = vadd.f32 %v383, %v647
      %v649 = vpop.f32.mrf.mxu0
      %v650 = vadd.f32 %v383, %v649
      %651 = vmatmul.bf16.gmra.mxu0 %v486
      %v652 = vpop.f32.mrf.mxu0
      %v653 = vadd.f32 %v383, %v652
      %v654 = vpop.f32.mrf.mxu0
      %v655 = vadd.f32 %v383, %v654
      %656 = vdwg.mxu0
      %v657 = vmax.f32 %v498, 0.0
      %v658 = vmax.f32 %v500, 0.0
      %v659 = vmax.f32 %v503, 0.0
      %v660 = vmax.f32 %v505, 0.0
      %v661 = vmax.f32 %v508, 0.0
      %v662 = vmax.f32 %v510, 0.0
      %v663 = vmax.f32 %v513, 0.0
      %v664 = vmax.f32 %v515, 0.0
      %v665 = vmax.f32 %v518, 0.0
      %v666 = vmax.f32 %v520, 0.0
      %v667 = vmax.f32 %v523, 0.0
      %v668 = vmax.f32 %v525, 0.0
      %v669 = vmax.f32 %v528, 0.0
      %v670 = vmax.f32 %v530, 0.0
      %v671 = vmax.f32 %v533, 0.0
      %v672 = vmax.f32 %v535, 0.0
      %v673 = vmax.f32 %v538, 0.0
      %v674 = vmax.f32 %v540, 0.0
      %v675 = vmax.f32 %v543, 0.0
      %v676 = vmax.f32 %v545, 0.0
      %v677 = vmax.f32 %v548, 0.0
      %v678 = vmax.f32 %v550, 0.0
      %v679 = vmax.f32 %v553, 0.0
      %v680 = vmax.f32 %v555, 0.0
      %v681 = vmax.f32 %v558, 0.0
      %v682 = vmax.f32 %v560, 0.0
      %v683 = vmax.f32 %v563, 0.0
      %v684 = vmax.f32 %v565, 0.0
      %v685 = vmax.f32 %v568, 0.0
      %v686 = vmax.f32 %v570, 0.0
      %v687 = vmax.f32 %v573, 0.0
      %v688 = vmax.f32 %v575, 0.0
      %v689 = vmax.f32 %v578, 0.0
      %v690 = vmax.f32 %v580, 0.0
      %v691 = vmax.f32 %v583, 0.0
      %v692 = vmax.f32 %v585, 0.0
      %v693 = vmax.f32 %v588, 0.0
      %v694 = vmax.f32 %v590, 0.0
      %v695 = vmax.f32 %v593, 0.0
      %v696 = vmax.f32 %v595, 0.0
      %v697 = vmax.f32 %v598, 0.0
      %v698 = vmax.f32 %v600, 0.0
      %v699 = vmax.f32 %v603, 0.0
      %v700 = vmax.f32 %v605, 0.0
      %v701 = vmax.f32 %v608, 0.0
      %v702 = vmax.f32 %v610, 0.0
      %v703 = vmax.f32 %v613, 0.0
      %v704 = vmax.f32 %v615, 0.0
      %v705 = vmax.f32 %v618, 0.0
      %v706 = vmax.f32 %v620, 0.0
      %v707 = vmax.f32 %v623, 0.0
      %v708 = vmax.f32 %v625, 0.0
      %v709 = vmax.f32 %v628, 0.0
      %v710 = vmax.f32 %v630, 0.0
      %v711 = vmax.f32 %v633, 0.0
      %v712 = vmax.f32 %v635, 0.0
      %v713 = vmax.f32 %v638, 0.0
      %v714 = vmax.f32 %v640, 0.0
      %v715 = vmax.f32 %v643, 0.0
      %v716 = vmax.f32 %v645, 0.0
      %v717 = vmax.f32 %v648, 0.0
      %v718 = vmax.f32 %v650, 0.0
      %v719 = vmax.f32 %v653, 0.0
      %v720 = vmax.f32 %v655, 0.0
      %v721 = vpack.c.bf16 %v658, %v657
      %v722 = vpack.c.bf16 %v660, %v659
      %v723 = vpack.c.bf16 %v662, %v661
      %v724 = vpack.c.bf16 %v664, %v663
      %v725 = vpack.c.bf16 %v666, %v665
      %v726 = vpack.c.bf16 %v668, %v667
      %v727 = vpack.c.bf16 %v670, %v669
      %v728 = vpack.c.bf16 %v672, %v671
      %v729 = vpack.c.bf16 %v674, %v673
      %v730 = vpack.c.bf16 %v676, %v675
      %v731 = vpack.c.bf16 %v678, %v677
      %v732 = vpack.c.bf16 %v680, %v679
      %v733 = vpack.c.bf16 %v682, %v681
      %v734 = vpack.c.bf16 %v684, %v683
      %v735 = vpack.c.bf16 %v686, %v685
      %v736 = vpack.c.bf16 %v688, %v687
      %v737 = vpack.c.bf16 %v690, %v689
      %v738 = vpack.c.bf16 %v692, %v691
      %v739 = vpack.c.bf16 %v694, %v693
      %v740 = vpack.c.bf16 %v696, %v695
      %v741 = vpack.c.bf16 %v698, %v697
      %v742 = vpack.c.bf16 %v700, %v699
      %v743 = vpack.c.bf16 %v702, %v701
      %v744 = vpack.c.bf16 %v704, %v703
      %v745 = vpack.c.bf16 %v706, %v705
      %v746 = vpack.c.bf16 %v708, %v707
      %v747 = vpack.c.bf16 %v710, %v709
      %v748 = vpack.c.bf16 %v712, %v711
      %v749 = vpack.c.bf16 %v714, %v713
      %v750 = vpack.c.bf16 %v716, %v715
      %v751 = vpack.c.bf16 %v718, %v717
      %v752 = vpack.c.bf16 %v720, %v719
      %v753 = vld [vmem:[%s3] sm:$0xf]
      %v754 = vld [vmem:[%s3 + $0x4] sm:$0xf]
      %v755 = vld [vmem:[%s3 + $0x8] sm:$0xf]
      %v756 = vld [vmem:[%s3 + $0xc] sm:$0xf]
      %v757 = vld [vmem:[%s3 + $0x10] sm:$0xf]
      %v758 = vld [vmem:[%s3 + $0x14] sm:$0xf]
      %v759 = vld [vmem:[%s3 + $0x18] sm:$0xf]
      %v760 = vld [vmem:[%s3 + $0x1c] sm:$0xf]
      %v761 = vld [vmem:[%s3 + $0x20] sm:$0xf]
      %v762 = vld [vmem:[%s3 + $0x24] sm:$0xf]
      %v763 = vld [vmem:[%s3 + $0x28] sm:$0xf]
      %v764 = vld [vmem:[%s3 + $0x2c] sm:$0xf]
      %v765 = vld [vmem:[%s3 + $0x30] sm:$0xf]
      %v766 = vld [vmem:[%s3 + $0x34] sm:$0xf]
      %v767 = vld [vmem:[%s3 + $0x38] sm:$0xf]
      %v768 = vld [vmem:[%s3 + $0x3c] sm:$0xf]
      %v769 = vld [vmem:[%s4] sm:$0x1]
      %v771 = vperm.slane %v769, 0
      %v789 = vunpack.c.l.b16 %v753
      %v790 = vunpack.c.l.b16 %v754
      %v791 = vunpack.c.l.b16 %v755
      %v792 = vunpack.c.l.b16 %v756
      %v793 = vunpack.c.l.b16 %v757
      %v794 = vunpack.c.l.b16 %v758
      %v795 = vunpack.c.l.b16 %v759
      %v796 = vunpack.c.l.b16 %v760
      %v797 = vunpack.c.l.b16 %v761
      %v798 = vunpack.c.l.b16 %v762
      %v799 = vunpack.c.l.b16 %v763
      %v800 = vunpack.c.l.b16 %v764
      %v801 = vunpack.c.l.b16 %v765
      %v802 = vunpack.c.l.b16 %v766
      %v803 = vunpack.c.l.b16 %v767
      %v804 = vunpack.c.l.b16 %v768
      %v805 = vpack.c.b16 %v790, %v789
      %v806 = vpack.c.b16 %v792, %v791
      %v807 = vpack.c.b16 %v794, %v793
      %v808 = vpack.c.b16 %v796, %v795
      %v809 = vpack.c.b16 %v798, %v797
      %v810 = vpack.c.b16 %v800, %v799
      %v811 = vpack.c.b16 %v802, %v801
      %v812 = vpack.c.b16 %v804, %v803
      %821 = vmatpush.bf16.msra.mxu0 %v812
      %822 = vmatpush.bf16.msra.mxu0 %v811
      %823 = vmatpush.bf16.msra.mxu0 %v810
      %824 = vmatpush.bf16.msra.mxu0 %v809
      %825 = vmatpush.bf16.msra.mxu0 %v808
      %826 = vmatpush.bf16.msra.mxu0 %v807
      %827 = vmatpush.bf16.msra.mxu0 %v806
      %828 = vmatpush.bf16.msra.mxu0 %v805
      %829 = vmatmul.bf16.gmra.mxu0 %v721
      %v830 = vpop.f32.mrf.mxu0
      %v831 = vadd.f32 %v771, %v830
      %v832 = vpop.f32.mrf.mxu0
      %v833 = vadd.f32 %v771, %v832
      %834 = vmatmul.bf16.gmra.mxu0 %v722
      %v835 = vpop.f32.mrf.mxu0
      %v836 = vadd.f32 %v771, %v835
      %v837 = vpop.f32.mrf.mxu0
      %v838 = vadd.f32 %v771, %v837
      %839 = vmatmul.bf16.gmra.mxu0 %v723
      %v840 = vpop.f32.mrf.mxu0
      %v841 = vadd.f32 %v771, %v840
      %v842 = vpop.f32.mrf.mxu0
      %v843 = vadd.f32 %v771, %v842
      %844 = vmatmul.bf16.gmra.mxu0 %v724
      %v845 = vpop.f32.mrf.mxu0
      %v846 = vadd.f32 %v771, %v845
      %v847 = vpop.f32.mrf.mxu0
      %v848 = vadd.f32 %v771, %v847
      %849 = vmatmul.bf16.gmra.mxu0 %v725
      %v850 = vpop.f32.mrf.mxu0
      %v851 = vadd.f32 %v771, %v850
      %v852 = vpop.f32.mrf.mxu0
      %v853 = vadd.f32 %v771, %v852
      %854 = vmatmul.bf16.gmra.mxu0 %v726
      %v855 = vpop.f32.mrf.mxu0
      %v856 = vadd.f32 %v771, %v855
      %v857 = vpop.f32.mrf.mxu0
      %v858 = vadd.f32 %v771, %v857
      %859 = vmatmul.bf16.gmra.mxu0 %v727
      %v860 = vpop.f32.mrf.mxu0
      %v861 = vadd.f32 %v771, %v860
      %v862 = vpop.f32.mrf.mxu0
      %v863 = vadd.f32 %v771, %v862
      %864 = vmatmul.bf16.gmra.mxu0 %v728
      %v865 = vpop.f32.mrf.mxu0
      %v866 = vadd.f32 %v771, %v865
      %v867 = vpop.f32.mrf.mxu0
      %v868 = vadd.f32 %v771, %v867
      %869 = vmatmul.bf16.gmra.mxu0 %v729
      %v870 = vpop.f32.mrf.mxu0
      %v871 = vadd.f32 %v771, %v870
      %v872 = vpop.f32.mrf.mxu0
      %v873 = vadd.f32 %v771, %v872
      %874 = vmatmul.bf16.gmra.mxu0 %v730
      %v875 = vpop.f32.mrf.mxu0
      %v876 = vadd.f32 %v771, %v875
      %v877 = vpop.f32.mrf.mxu0
      %v878 = vadd.f32 %v771, %v877
      %879 = vmatmul.bf16.gmra.mxu0 %v731
      %v880 = vpop.f32.mrf.mxu0
      %v881 = vadd.f32 %v771, %v880
      %v882 = vpop.f32.mrf.mxu0
      %v883 = vadd.f32 %v771, %v882
      %884 = vmatmul.bf16.gmra.mxu0 %v732
      %v885 = vpop.f32.mrf.mxu0
      %v886 = vadd.f32 %v771, %v885
      %v887 = vpop.f32.mrf.mxu0
      %v888 = vadd.f32 %v771, %v887
      %889 = vmatmul.bf16.gmra.mxu0 %v733
      %v890 = vpop.f32.mrf.mxu0
      %v891 = vadd.f32 %v771, %v890
      %v892 = vpop.f32.mrf.mxu0
      %v893 = vadd.f32 %v771, %v892
      %894 = vmatmul.bf16.gmra.mxu0 %v734
      %v895 = vpop.f32.mrf.mxu0
      %v896 = vadd.f32 %v771, %v895
      %v897 = vpop.f32.mrf.mxu0
      %v898 = vadd.f32 %v771, %v897
      %899 = vmatmul.bf16.gmra.mxu0 %v735
      %v900 = vpop.f32.mrf.mxu0
      %v901 = vadd.f32 %v771, %v900
      %v902 = vpop.f32.mrf.mxu0
      %v903 = vadd.f32 %v771, %v902
      %904 = vmatmul.bf16.gmra.mxu0 %v736
      %v905 = vpop.f32.mrf.mxu0
      %v906 = vadd.f32 %v771, %v905
      %v907 = vpop.f32.mrf.mxu0
      %v908 = vadd.f32 %v771, %v907
      %909 = vmatmul.bf16.gmra.mxu0 %v737
      %v910 = vpop.f32.mrf.mxu0
      %v911 = vadd.f32 %v771, %v910
      %v912 = vpop.f32.mrf.mxu0
      %v913 = vadd.f32 %v771, %v912
      %914 = vmatmul.bf16.gmra.mxu0 %v738
      %v915 = vpop.f32.mrf.mxu0
      %v916 = vadd.f32 %v771, %v915
      %v917 = vpop.f32.mrf.mxu0
      %v918 = vadd.f32 %v771, %v917
      %919 = vmatmul.bf16.gmra.mxu0 %v739
      %v920 = vpop.f32.mrf.mxu0
      %v921 = vadd.f32 %v771, %v920
      %v922 = vpop.f32.mrf.mxu0
      %v923 = vadd.f32 %v771, %v922
      %924 = vmatmul.bf16.gmra.mxu0 %v740
      %v925 = vpop.f32.mrf.mxu0
      %v926 = vadd.f32 %v771, %v925
      %v927 = vpop.f32.mrf.mxu0
      %v928 = vadd.f32 %v771, %v927
      %929 = vmatmul.bf16.gmra.mxu0 %v741
      %v930 = vpop.f32.mrf.mxu0
      %v931 = vadd.f32 %v771, %v930
      %v932 = vpop.f32.mrf.mxu0
      %v933 = vadd.f32 %v771, %v932
      %934 = vmatmul.bf16.gmra.mxu0 %v742
      %v935 = vpop.f32.mrf.mxu0
      %v936 = vadd.f32 %v771, %v935
      %v937 = vpop.f32.mrf.mxu0
      %v938 = vadd.f32 %v771, %v937
      %939 = vmatmul.bf16.gmra.mxu0 %v743
      %v940 = vpop.f32.mrf.mxu0
      %v941 = vadd.f32 %v771, %v940
      %v942 = vpop.f32.mrf.mxu0
      %v943 = vadd.f32 %v771, %v942
      %944 = vmatmul.bf16.gmra.mxu0 %v744
      %v945 = vpop.f32.mrf.mxu0
      %v946 = vadd.f32 %v771, %v945
      %v947 = vpop.f32.mrf.mxu0
      %v948 = vadd.f32 %v771, %v947
      %949 = vmatmul.bf16.gmra.mxu0 %v745
      %v950 = vpop.f32.mrf.mxu0
      %v951 = vadd.f32 %v771, %v950
      %v952 = vpop.f32.mrf.mxu0
      %v953 = vadd.f32 %v771, %v952
      %954 = vmatmul.bf16.gmra.mxu0 %v746
      %v955 = vpop.f32.mrf.mxu0
      %v956 = vadd.f32 %v771, %v955
      %v957 = vpop.f32.mrf.mxu0
      %v958 = vadd.f32 %v771, %v957
      %959 = vmatmul.bf16.gmra.mxu0 %v747
      %v960 = vpop.f32.mrf.mxu0
      %v961 = vadd.f32 %v771, %v960
      %v962 = vpop.f32.mrf.mxu0
      %v963 = vadd.f32 %v771, %v962
      %964 = vmatmul.bf16.gmra.mxu0 %v748
      %v965 = vpop.f32.mrf.mxu0
      %v966 = vadd.f32 %v771, %v965
      %v967 = vpop.f32.mrf.mxu0
      %v968 = vadd.f32 %v771, %v967
      %969 = vmatmul.bf16.gmra.mxu0 %v749
      %v970 = vpop.f32.mrf.mxu0
      %v971 = vadd.f32 %v771, %v970
      %v972 = vpop.f32.mrf.mxu0
      %v973 = vadd.f32 %v771, %v972
      %974 = vmatmul.bf16.gmra.mxu0 %v750
      %v975 = vpop.f32.mrf.mxu0
      %v976 = vadd.f32 %v771, %v975
      %v977 = vpop.f32.mrf.mxu0
      %v978 = vadd.f32 %v771, %v977
      %979 = vmatmul.bf16.gmra.mxu0 %v751
      %v980 = vpop.f32.mrf.mxu0
      %v981 = vadd.f32 %v771, %v980
      %v982 = vpop.f32.mrf.mxu0
      %v983 = vadd.f32 %v771, %v982
      %984 = vmatmul.bf16.gmra.mxu0 %v752
      %v985 = vpop.f32.mrf.mxu0
      %v986 = vadd.f32 %v771, %v985
      %v987 = vpop.f32.mrf.mxu0
      %v988 = vadd.f32 %v771, %v987
      %989 = vdwg.mxu0
      %v990 = vmax.f32 %v831, 0.0
      %v991 = vmax.f32 %v833, 0.0
      %v992 = vmax.f32 %v836, 0.0
      %v993 = vmax.f32 %v838, 0.0
      %v994 = vmax.f32 %v841, 0.0
      %v995 = vmax.f32 %v843, 0.0
      %v996 = vmax.f32 %v846, 0.0
      %v997 = vmax.f32 %v848, 0.0
      %v998 = vmax.f32 %v851, 0.0
      %v999 = vmax.f32 %v853, 0.0
      %v1000 = vmax.f32 %v856, 0.0
      %v1001 = vmax.f32 %v858, 0.0
      %v1002 = vmax.f32 %v861, 0.0
      %v1003 = vmax.f32 %v863, 0.0
      %v1004 = vmax.f32 %v866, 0.0
      %v1005 = vmax.f32 %v868, 0.0
      %v1006 = vmax.f32 %v871, 0.0
      %v1007 = vmax.f32 %v873, 0.0
      %v1008 = vmax.f32 %v876, 0.0
      %v1009 = vmax.f32 %v878, 0.0
      %v1010 = vmax.f32 %v881, 0.0
      %v1011 = vmax.f32 %v883, 0.0
      %v1012 = vmax.f32 %v886, 0.0
      %v1013 = vmax.f32 %v888, 0.0
      %v1014 = vmax.f32 %v891, 0.0
      %v1015 = vmax.f32 %v893, 0.0
      %v1016 = vmax.f32 %v896, 0.0
      %v1017 = vmax.f32 %v898, 0.0
      %v1018 = vmax.f32 %v901, 0.0
      %v1019 = vmax.f32 %v903, 0.0
      %v1020 = vmax.f32 %v906, 0.0
      %v1021 = vmax.f32 %v908, 0.0
      %v1022 = vmax.f32 %v911, 0.0
      %v1023 = vmax.f32 %v913, 0.0
      %v1024 = vmax.f32 %v916, 0.0
      %v1025 = vmax.f32 %v918, 0.0
      %v1026 = vmax.f32 %v921, 0.0
      %v1027 = vmax.f32 %v923, 0.0
      %v1028 = vmax.f32 %v926, 0.0
      %v1029 = vmax.f32 %v928, 0.0
      %v1030 = vmax.f32 %v931, 0.0
      %v1031 = vmax.f32 %v933, 0.0
      %v1032 = vmax.f32 %v936, 0.0
      %v1033 = vmax.f32 %v938, 0.0
      %v1034 = vmax.f32 %v941, 0.0
      %v1035 = vmax.f32 %v943, 0.0
      %v1036 = vmax.f32 %v946, 0.0
      %v1037 = vmax.f32 %v948, 0.0
      %v1038 = vmax.f32 %v951, 0.0
      %v1039 = vmax.f32 %v953, 0.0
      %v1040 = vmax.f32 %v956, 0.0
      %v1041 = vmax.f32 %v958, 0.0
      %v1042 = vmax.f32 %v961, 0.0
      %v1043 = vmax.f32 %v963, 0.0
      %v1044 = vmax.f32 %v966, 0.0
      %v1045 = vmax.f32 %v968, 0.0
      %v1046 = vmax.f32 %v971, 0.0
      %v1047 = vmax.f32 %v973, 0.0
      %v1048 = vmax.f32 %v976, 0.0
      %v1049 = vmax.f32 %v978, 0.0
      %v1050 = vmax.f32 %v981, 0.0
      %v1051 = vmax.f32 %v983, 0.0
      %v1052 = vmax.f32 %v986, 0.0
      %v1053 = vmax.f32 %v988, 0.0
      %v1054 = vpack.c.bf16 %v991, %v990
      %v1055 = vpack.c.bf16 %v993, %v992
      %v1056 = vpack.c.bf16 %v995, %v994
      %v1057 = vpack.c.bf16 %v997, %v996
      %v1058 = vpack.c.bf16 %v999, %v998
      %v1059 = vpack.c.bf16 %v1001, %v1000
      %v1060 = vpack.c.bf16 %v1003, %v1002
      %v1061 = vpack.c.bf16 %v1005, %v1004
      %v1062 = vpack.c.bf16 %v1007, %v1006
      %v1063 = vpack.c.bf16 %v1009, %v1008
      %v1064 = vpack.c.bf16 %v1011, %v1010
      %v1065 = vpack.c.bf16 %v1013, %v1012
      %v1066 = vpack.c.bf16 %v1015, %v1014
      %v1067 = vpack.c.bf16 %v1017, %v1016
      %v1068 = vpack.c.bf16 %v1019, %v1018
      %v1069 = vpack.c.bf16 %v1021, %v1020
      %v1070 = vpack.c.bf16 %v1023, %v1022
      %v1071 = vpack.c.bf16 %v1025, %v1024
      %v1072 = vpack.c.bf16 %v1027, %v1026
      %v1073 = vpack.c.bf16 %v1029, %v1028
      %v1074 = vpack.c.bf16 %v1031, %v1030
      %v1075 = vpack.c.bf16 %v1033, %v1032
      %v1076 = vpack.c.bf16 %v1035, %v1034
      %v1077 = vpack.c.bf16 %v1037, %v1036
      %v1078 = vpack.c.bf16 %v1039, %v1038
      %v1079 = vpack.c.bf16 %v1041, %v1040
      %v1080 = vpack.c.bf16 %v1043, %v1042
      %v1081 = vpack.c.bf16 %v1045, %v1044
      %v1082 = vpack.c.bf16 %v1047, %v1046
      %v1083 = vpack.c.bf16 %v1049, %v1048
      %v1084 = vpack.c.bf16 %v1051, %v1050
      %v1085 = vpack.c.bf16 %v1053, %v1052
      %v1086 = vld [vmem:[%s5] sm:$0xf]
      %v1087 = vld [vmem:[%s5 + $0x4] sm:$0xf]
      %v1088 = vld [vmem:[%s5 + $0x8] sm:$0xf]
      %v1089 = vld [vmem:[%s5 + $0xc] sm:$0xf]
      %v1090 = vld [vmem:[%s5 + $0x10] sm:$0xf]
      %v1091 = vld [vmem:[%s5 + $0x14] sm:$0xf]
      %v1092 = vld [vmem:[%s5 + $0x18] sm:$0xf]
      %v1093 = vld [vmem:[%s5 + $0x1c] sm:$0xf]
      %v1094 = vld [vmem:[%s5 + $0x20] sm:$0xf]
      %v1095 = vld [vmem:[%s5 + $0x24] sm:$0xf]
      %v1096 = vld [vmem:[%s5 + $0x28] sm:$0xf]
      %v1097 = vld [vmem:[%s5 + $0x2c] sm:$0xf]
      %v1098 = vld [vmem:[%s5 + $0x30] sm:$0xf]
      %v1099 = vld [vmem:[%s5 + $0x34] sm:$0xf]
      %v1100 = vld [vmem:[%s5 + $0x38] sm:$0xf]
      %v1101 = vld [vmem:[%s5 + $0x3c] sm:$0xf]
      %v1102 = vld [vmem:[%s6] sm:$0x1]
      %v1104 = vperm.slane %v1102, 0
      %v1122 = vunpack.c.l.b16 %v1086
      %v1123 = vunpack.c.l.b16 %v1087
      %v1124 = vunpack.c.l.b16 %v1088
      %v1125 = vunpack.c.l.b16 %v1089
      %v1126 = vunpack.c.l.b16 %v1090
      %v1127 = vunpack.c.l.b16 %v1091
      %v1128 = vunpack.c.l.b16 %v1092
      %v1129 = vunpack.c.l.b16 %v1093
      %v1130 = vunpack.c.l.b16 %v1094
      %v1131 = vunpack.c.l.b16 %v1095
      %v1132 = vunpack.c.l.b16 %v1096
      %v1133 = vunpack.c.l.b16 %v1097
      %v1134 = vunpack.c.l.b16 %v1098
      %v1135 = vunpack.c.l.b16 %v1099
      %v1136 = vunpack.c.l.b16 %v1100
      %v1137 = vunpack.c.l.b16 %v1101
      %v1138 = vpack.c.b16 %v1123, %v1122
      %v1139 = vpack.c.b16 %v1125, %v1124
      %v1140 = vpack.c.b16 %v1127, %v1126
      %v1141 = vpack.c.b16 %v1129, %v1128
      %v1142 = vpack.c.b16 %v1131, %v1130
      %v1143 = vpack.c.b16 %v1133, %v1132
      %v1144 = vpack.c.b16 %v1135, %v1134
      %v1145 = vpack.c.b16 %v1137, %v1136
      %1154 = vmatpush.bf16.msra.mxu0 %v1145
      %1155 = vmatpush.bf16.msra.mxu0 %v1144
      %1156 = vmatpush.bf16.msra.mxu0 %v1143
      %1157 = vmatpush.bf16.msra.mxu0 %v1142
      %1158 = vmatpush.bf16.msra.mxu0 %v1141
      %1159 = vmatpush.bf16.msra.mxu0 %v1140
      %1160 = vmatpush.bf16.msra.mxu0 %v1139
      %1161 = vmatpush.bf16.msra.mxu0 %v1138
      %1162 = vmatmul.bf16.gmra.mxu0 %v1054
      %v1163 = vpop.f32.mrf.mxu0
      %v1164 = vadd.f32 %v1104, %v1163
      %v1165 = vpop.f32.mrf.mxu0
      %v1166 = vadd.f32 %v1104, %v1165
      %1167 = vmatmul.bf16.gmra.mxu0 %v1055
      %v1168 = vpop.f32.mrf.mxu0
      %v1169 = vadd.f32 %v1104, %v1168
      %v1170 = vpop.f32.mrf.mxu0
      %v1171 = vadd.f32 %v1104, %v1170
      %1172 = vmatmul.bf16.gmra.mxu0 %v1056
      %v1173 = vpop.f32.mrf.mxu0
      %v1174 = vadd.f32 %v1104, %v1173
      %v1175 = vpop.f32.mrf.mxu0
      %v1176 = vadd.f32 %v1104, %v1175
      %1177 = vmatmul.bf16.gmra.mxu0 %v1057
      %v1178 = vpop.f32.mrf.mxu0
      %v1179 = vadd.f32 %v1104, %v1178
      %v1180 = vpop.f32.mrf.mxu0
      %v1181 = vadd.f32 %v1104, %v1180
      %1182 = vmatmul.bf16.gmra.mxu0 %v1058
      %v1183 = vpop.f32.mrf.mxu0
      %v1184 = vadd.f32 %v1104, %v1183
      %v1185 = vpop.f32.mrf.mxu0
      %v1186 = vadd.f32 %v1104, %v1185
      %1187 = vmatmul.bf16.gmra.mxu0 %v1059
      %v1188 = vpop.f32.mrf.mxu0
      %v1189 = vadd.f32 %v1104, %v1188
      %v1190 = vpop.f32.mrf.mxu0
      %v1191 = vadd.f32 %v1104, %v1190
      %1192 = vmatmul.bf16.gmra.mxu0 %v1060
      %v1193 = vpop.f32.mrf.mxu0
      %v1194 = vadd.f32 %v1104, %v1193
      %v1195 = vpop.f32.mrf.mxu0
      %v1196 = vadd.f32 %v1104, %v1195
      %1197 = vmatmul.bf16.gmra.mxu0 %v1061
      %v1198 = vpop.f32.mrf.mxu0
      %v1199 = vadd.f32 %v1104, %v1198
      %v1200 = vpop.f32.mrf.mxu0
      %v1201 = vadd.f32 %v1104, %v1200
      %1202 = vmatmul.bf16.gmra.mxu0 %v1062
      %v1203 = vpop.f32.mrf.mxu0
      %v1204 = vadd.f32 %v1104, %v1203
      %v1205 = vpop.f32.mrf.mxu0
      %v1206 = vadd.f32 %v1104, %v1205
      %1207 = vmatmul.bf16.gmra.mxu0 %v1063
      %v1208 = vpop.f32.mrf.mxu0
      %v1209 = vadd.f32 %v1104, %v1208
      %v1210 = vpop.f32.mrf.mxu0
      %v1211 = vadd.f32 %v1104, %v1210
      %1212 = vmatmul.bf16.gmra.mxu0 %v1064
      %v1213 = vpop.f32.mrf.mxu0
      %v1214 = vadd.f32 %v1104, %v1213
      %v1215 = vpop.f32.mrf.mxu0
      %v1216 = vadd.f32 %v1104, %v1215
      %1217 = vmatmul.bf16.gmra.mxu0 %v1065
      %v1218 = vpop.f32.mrf.mxu0
      %v1219 = vadd.f32 %v1104, %v1218
      %v1220 = vpop.f32.mrf.mxu0
      %v1221 = vadd.f32 %v1104, %v1220
      %1222 = vmatmul.bf16.gmra.mxu0 %v1066
      %v1223 = vpop.f32.mrf.mxu0
      %v1224 = vadd.f32 %v1104, %v1223
      %v1225 = vpop.f32.mrf.mxu0
      %v1226 = vadd.f32 %v1104, %v1225
      %1227 = vmatmul.bf16.gmra.mxu0 %v1067
      %v1228 = vpop.f32.mrf.mxu0
      %v1229 = vadd.f32 %v1104, %v1228
      %v1230 = vpop.f32.mrf.mxu0
      %v1231 = vadd.f32 %v1104, %v1230
      %1232 = vmatmul.bf16.gmra.mxu0 %v1068
      %v1233 = vpop.f32.mrf.mxu0
      %v1234 = vadd.f32 %v1104, %v1233
      %v1235 = vpop.f32.mrf.mxu0
      %v1236 = vadd.f32 %v1104, %v1235
      %1237 = vmatmul.bf16.gmra.mxu0 %v1069
      %v1238 = vpop.f32.mrf.mxu0
      %v1239 = vadd.f32 %v1104, %v1238
      %v1240 = vpop.f32.mrf.mxu0
      %v1241 = vadd.f32 %v1104, %v1240
      %1242 = vmatmul.bf16.gmra.mxu0 %v1070
      %v1243 = vpop.f32.mrf.mxu0
      %v1244 = vadd.f32 %v1104, %v1243
      %v1245 = vpop.f32.mrf.mxu0
      %v1246 = vadd.f32 %v1104, %v1245
      %1247 = vmatmul.bf16.gmra.mxu0 %v1071
      %v1248 = vpop.f32.mrf.mxu0
      %v1249 = vadd.f32 %v1104, %v1248
      %v1250 = vpop.f32.mrf.mxu0
      %v1251 = vadd.f32 %v1104, %v1250
      %1252 = vmatmul.bf16.gmra.mxu0 %v1072
      %v1253 = vpop.f32.mrf.mxu0
      %v1254 = vadd.f32 %v1104, %v1253
      %v1255 = vpop.f32.mrf.mxu0
      %v1256 = vadd.f32 %v1104, %v1255
      %1257 = vmatmul.bf16.gmra.mxu0 %v1073
      %v1258 = vpop.f32.mrf.mxu0
      %v1259 = vadd.f32 %v1104, %v1258
      %v1260 = vpop.f32.mrf.mxu0
      %v1261 = vadd.f32 %v1104, %v1260
      %1262 = vmatmul.bf16.gmra.mxu0 %v1074
      %v1263 = vpop.f32.mrf.mxu0
      %v1264 = vadd.f32 %v1104, %v1263
      %v1265 = vpop.f32.mrf.mxu0
      %v1266 = vadd.f32 %v1104, %v1265
      %1267 = vmatmul.bf16.gmra.mxu0 %v1075
      %v1268 = vpop.f32.mrf.mxu0
      %v1269 = vadd.f32 %v1104, %v1268
      %v1270 = vpop.f32.mrf.mxu0
      %v1271 = vadd.f32 %v1104, %v1270
      %1272 = vmatmul.bf16.gmra.mxu0 %v1076
      %v1273 = vpop.f32.mrf.mxu0
      %v1274 = vadd.f32 %v1104, %v1273
      %v1275 = vpop.f32.mrf.mxu0
      %v1276 = vadd.f32 %v1104, %v1275
      %1277 = vmatmul.bf16.gmra.mxu0 %v1077
      %v1278 = vpop.f32.mrf.mxu0
      %v1279 = vadd.f32 %v1104, %v1278
      %v1280 = vpop.f32.mrf.mxu0
      %v1281 = vadd.f32 %v1104, %v1280
      %1282 = vmatmul.bf16.gmra.mxu0 %v1078
      %v1283 = vpop.f32.mrf.mxu0
      %v1284 = vadd.f32 %v1104, %v1283
      %v1285 = vpop.f32.mrf.mxu0
      %v1286 = vadd.f32 %v1104, %v1285
      %1287 = vmatmul.bf16.gmra.mxu0 %v1079
      %v1288 = vpop.f32.mrf.mxu0
      %v1289 = vadd.f32 %v1104, %v1288
      %v1290 = vpop.f32.mrf.mxu0
      %v1291 = vadd.f32 %v1104, %v1290
      %1292 = vmatmul.bf16.gmra.mxu0 %v1080
      %v1293 = vpop.f32.mrf.mxu0
      %v1294 = vadd.f32 %v1104, %v1293
      %v1295 = vpop.f32.mrf.mxu0
      %v1296 = vadd.f32 %v1104, %v1295
      %1297 = vmatmul.bf16.gmra.mxu0 %v1081
      %v1298 = vpop.f32.mrf.mxu0
      %v1299 = vadd.f32 %v1104, %v1298
      %v1300 = vpop.f32.mrf.mxu0
      %v1301 = vadd.f32 %v1104, %v1300
      %1302 = vmatmul.bf16.gmra.mxu0 %v1082
      %v1303 = vpop.f32.mrf.mxu0
      %v1304 = vadd.f32 %v1104, %v1303
      %v1305 = vpop.f32.mrf.mxu0
      %v1306 = vadd.f32 %v1104, %v1305
      %1307 = vmatmul.bf16.gmra.mxu0 %v1083
      %v1308 = vpop.f32.mrf.mxu0
      %v1309 = vadd.f32 %v1104, %v1308
      %v1310 = vpop.f32.mrf.mxu0
      %v1311 = vadd.f32 %v1104, %v1310
      %1312 = vmatmul.bf16.gmra.mxu0 %v1084
      %v1313 = vpop.f32.mrf.mxu0
      %v1314 = vadd.f32 %v1104, %v1313
      %v1315 = vpop.f32.mrf.mxu0
      %v1316 = vadd.f32 %v1104, %v1315
      %1317 = vmatmul.bf16.gmra.mxu0 %v1085
      %v1318 = vpop.f32.mrf.mxu0
      %v1319 = vadd.f32 %v1104, %v1318
      %v1320 = vpop.f32.mrf.mxu0
      %v1321 = vadd.f32 %v1104, %v1320
      %1322 = vdwg.mxu0
      %vm1323 = vcmask 31744
      %1324 = vst.msk [vmem:[%s280] sm:$0xff] %vm1323, %v1164
      %1325 = vst.msk [vmem:[%s280 + $0x8] sm:$0xff] %vm1323, %v1166
      %1326 = vst.msk [vmem:[%s280 + $0x10] sm:$0xff] %vm1323, %v1169
      %1327 = vst.msk [vmem:[%s280 + $0x18] sm:$0xff] %vm1323, %v1171
      %1328 = vst.msk [vmem:[%s280 + $0x20] sm:$0xff] %vm1323, %v1174
      %1329 = vst.msk [vmem:[%s280 + $0x28] sm:$0xff] %vm1323, %v1176
      %1330 = vst.msk [vmem:[%s280 + $0x30] sm:$0xff] %vm1323, %v1179
      %1331 = vst.msk [vmem:[%s280 + $0x38] sm:$0xff] %vm1323, %v1181
      %1332 = vst.msk [vmem:[%s280 + $0x40] sm:$0xff] %vm1323, %v1184
      %1333 = vst.msk [vmem:[%s280 + $0x48] sm:$0xff] %vm1323, %v1186
      %1334 = vst.msk [vmem:[%s280 + $0x50] sm:$0xff] %vm1323, %v1189
      %1335 = vst.msk [vmem:[%s280 + $0x58] sm:$0xff] %vm1323, %v1191
      %1336 = vst.msk [vmem:[%s280 + $0x60] sm:$0xff] %vm1323, %v1194
      %1337 = vst.msk [vmem:[%s280 + $0x68] sm:$0xff] %vm1323, %v1196
      %1338 = vst.msk [vmem:[%s280 + $0x70] sm:$0xff] %vm1323, %v1199
      %1339 = vst.msk [vmem:[%s280 + $0x78] sm:$0xff] %vm1323, %v1201
      %1340 = vst.msk [vmem:[%s280 + $0x80] sm:$0xff] %vm1323, %v1204
      %1341 = vst.msk [vmem:[%s280 + $0x88] sm:$0xff] %vm1323, %v1206
      %1342 = vst.msk [vmem:[%s280 + $0x90] sm:$0xff] %vm1323, %v1209
      %1343 = vst.msk [vmem:[%s280 + $0x98] sm:$0xff] %vm1323, %v1211
      %1344 = vst.msk [vmem:[%s280 + $0xa0] sm:$0xff] %vm1323, %v1214
      %1345 = vst.msk [vmem:[%s280 + $0xa8] sm:$0xff] %vm1323, %v1216
      %1346 = vst.msk [vmem:[%s280 + $0xb0] sm:$0xff] %vm1323, %v1219
      %1347 = vst.msk [vmem:[%s280 + $0xb8] sm:$0xff] %vm1323, %v1221
      %1348 = vst.msk [vmem:[%s280 + $0xc0] sm:$0xff] %vm1323, %v1224
      %1349 = vst.msk [vmem:[%s280 + $0xc8] sm:$0xff] %vm1323, %v1226
      %1350 = vst.msk [vmem:[%s280 + $0xd0] sm:$0xff] %vm1323, %v1229
      %1351 = vst.msk [vmem:[%s280 + $0xd8] sm:$0xff] %vm1323, %v1231
      %1352 = vst.msk [vmem:[%s280 + $0xe0] sm:$0xff] %vm1323, %v1234
      %1353 = vst.msk [vmem:[%s280 + $0xe8] sm:$0xff] %vm1323, %v1236
      %1354 = vst.msk [vmem:[%s280 + $0xf0] sm:$0xff] %vm1323, %v1239
      %1355 = vst.msk [vmem:[%s280 + $0xf8] sm:$0xff] %vm1323, %v1241
      %1356 = vst.msk [vmem:[%s280 + $0x100] sm:$0xff] %vm1323, %v1244
      %1357 = vst.msk [vmem:[%s280 + $0x108] sm:$0xff] %vm1323, %v1246
      %1358 = vst.msk [vmem:[%s280 + $0x110] sm:$0xff] %vm1323, %v1249
      %1359 = vst.msk [vmem:[%s280 + $0x118] sm:$0xff] %vm1323, %v1251
      %1360 = vst.msk [vmem:[%s280 + $0x120] sm:$0xff] %vm1323, %v1254
      %1361 = vst.msk [vmem:[%s280 + $0x128] sm:$0xff] %vm1323, %v1256
      %1362 = vst.msk [vmem:[%s280 + $0x130] sm:$0xff] %vm1323, %v1259
      %1363 = vst.msk [vmem:[%s280 + $0x138] sm:$0xff] %vm1323, %v1261
      %1364 = vst.msk [vmem:[%s280 + $0x140] sm:$0xff] %vm1323, %v1264
      %1365 = vst.msk [vmem:[%s280 + $0x148] sm:$0xff] %vm1323, %v1266
      %1366 = vst.msk [vmem:[%s280 + $0x150] sm:$0xff] %vm1323, %v1269
      %1367 = vst.msk [vmem:[%s280 + $0x158] sm:$0xff] %vm1323, %v1271
      %1368 = vst.msk [vmem:[%s280 + $0x160] sm:$0xff] %vm1323, %v1274
      %1369 = vst.msk [vmem:[%s280 + $0x168] sm:$0xff] %vm1323, %v1276
      %1370 = vst.msk [vmem:[%s280 + $0x170] sm:$0xff] %vm1323, %v1279
      %1371 = vst.msk [vmem:[%s280 + $0x178] sm:$0xff] %vm1323, %v1281
      %1372 = vst.msk [vmem:[%s280 + $0x180] sm:$0xff] %vm1323, %v1284
      %1373 = vst.msk [vmem:[%s280 + $0x188] sm:$0xff] %vm1323, %v1286
      %1374 = vst.msk [vmem:[%s280 + $0x190] sm:$0xff] %vm1323, %v1289
      %1375 = vst.msk [vmem:[%s280 + $0x198] sm:$0xff] %vm1323, %v1291
      %1376 = vst.msk [vmem:[%s280 + $0x1a0] sm:$0xff] %vm1323, %v1294
      %1377 = vst.msk [vmem:[%s280 + $0x1a8] sm:$0xff] %vm1323, %v1296
      %1378 = vst.msk [vmem:[%s280 + $0x1b0] sm:$0xff] %vm1323, %v1299
      %1379 = vst.msk [vmem:[%s280 + $0x1b8] sm:$0xff] %vm1323, %v1301
      %1380 = vst.msk [vmem:[%s280 + $0x1c0] sm:$0xff] %vm1323, %v1304
      %1381 = vst.msk [vmem:[%s280 + $0x1c8] sm:$0xff] %vm1323, %v1306
      %1382 = vst.msk [vmem:[%s280 + $0x1d0] sm:$0xff] %vm1323, %v1309
      %1383 = vst.msk [vmem:[%s280 + $0x1d8] sm:$0xff] %vm1323, %v1311
      %1384 = vst.msk [vmem:[%s280 + $0x1e0] sm:$0xff] %vm1323, %v1314
      %1385 = vst.msk [vmem:[%s280 + $0x1e8] sm:$0xff] %vm1323, %v1316
      %1386 = vst.msk [vmem:[%s280 + $0x1f0] sm:$0xff] %vm1323, %v1319
      %1387 = vst.msk [vmem:[%s280 + $0x1f8] sm:$0xff] %vm1323, %v1321
      %s1388 = smul.u32 64, %s18
      %p1389 = scmp.lt.s32.totalorder %s1388, 127
      %s1390 = scalar_select %p1389, %s1388, 127
      %s1391 = smul.addr %s1390, 8
      %s1392 = scalar_lea.vmem %s7, %s1391
      // Predicated region
      $region49: #{tpu_custom_call.1} parent=47 // pred_check
        %p1393 = pneg %p188
      $region50: #{tpu_custom_call.1} parent=47 // pred_check_branch
        %1395 = sbr.rel (%p1393) target = $region52
      $region51: #{tpu_custom_call.1} parent=47 // pred_region
        %s1396 = smul.u32 64, %s18
      $region52: #{tpu_custom_call.1} parent=47 // pred_fallthru
        _
    $region48: #{tpu_custom_call.1} parent=5 // pred_fallthru
      _
    %p1397 = scmp.le.s32.totalorder 2, %s13
    // Predicated region
    $region53: #{tpu_custom_call.1} parent=5 // pred_check
      %p1398 = pneg %p1397
    $region54: #{tpu_custom_call.1} parent=5 // pred_check_branch
      %1400 = sbr.rel (%p1398) target = $region56
    $region55: #{tpu_custom_call.1} parent=5 // pred_region
      %s1401 = ssub.s32 %s13, 2
      // Predicated region
      $region57: #{tpu_custom_call.1} parent=55 // pred_check
        %p1402 = pneg %p194
      $region58: #{tpu_custom_call.1} parent=55 // pred_check_branch
        %1404 = sbr.rel (%p1402) target = $region60
      $region59: #{tpu_custom_call.1} parent=55 // pred_region
        %s1405 = smul.u32 64, %s19
        %p1406 = scmp.lt.s32.totalorder %s1405, 127
        %s1407 = scalar_select %p1406, %s1405, 127
        %s1408 = smul.addr %s1407, 8
        %s1409 = scalar_lea.vmem %s7, %s1408
      $region60: #{tpu_custom_call.1} parent=55 // pred_fallthru
        _
    $region56: #{tpu_custom_call.1} parent=5 // pred_fallthru
      _
  $region6: #{tpu_custom_call.1} parent=0 // loop_footer
    %s17 = sadd.s32 1, %s13
  $region7: #{tpu_custom_call.1} parent=0 // loop_footer_branch
    %12 = sbr.rel target = $region3
  $region8: #{tpu_custom_call.1} parent=0 // loop_exit
    _

</llo_original>
